<compile_context>
chip_gen: v5e
topology: v5e:2x2
jax: 0.10.0
libtpu: 0.0.40
codegen_flags: <defaults>
</compile_context>

<pallas_src>
import functools

import jax
import jax.numpy as jnp
from jax import lax
from jax.experimental import pallas as pl
from jax.experimental.pallas import tpu as pltpu

P_DROP = 0.9
BN_EPS = 1e-5
LANE = 128
SUBLANE = 8


def _dqn_kernel(x_ref, mask_ref,
                w1_ref, g1_ref, be1_ref,
                w2_ref, g2_ref, be2_ref,
                w3_ref, g3_ref, be3_ref,
                o_ref, *, inv_b):
    def bn_dropout_relu(h, gamma_eff, beta_eff, mask_full):
        # Training-mode BatchNorm1d.  Padded batch rows of h are exactly zero
        # (zero inputs, no linear bias), so sums over the padded block equal
        # sums over the real rows; divide by the real batch size.
        s1 = jnp.sum(h, axis=0, keepdims=True)
        s2 = jnp.sum(h * h, axis=0, keepdims=True)
        mean = s1 * inv_b
        var = s2 * inv_b - mean * mean          # biased variance (PyTorch norm)
        # Fold normalize + affine into one per-feature scale/shift.
        # gamma_eff / beta_eff already carry the 1/(1-p) dropout scale.
        scale = gamma_eff * lax.rsqrt(var + BN_EPS)
        shift = beta_eff - mean * scale
        y = h * scale + shift
        mask = mask_full[:, : h.shape[1]]
        # relu(dropout(y)) == relu(y) * binary_mask (mask and 1/(1-p) are >= 0).
        # Mask rows for padded batch entries are zero -> padded rows stay zero.
        return jnp.maximum(y, 0.0) * mask

    h = jnp.dot(x_ref[...], w1_ref[...], preferred_element_type=jnp.float32)
    h = bn_dropout_relu(h, g1_ref[...], be1_ref[...], mask_ref[0])

    h = jnp.dot(h.astype(w2_ref.dtype), w2_ref[...],
                preferred_element_type=jnp.float32)
    h = bn_dropout_relu(h, g2_ref[...], be2_ref[...], mask_ref[1])

    h = jnp.dot(h.astype(w3_ref.dtype), w3_ref[...],
                preferred_element_type=jnp.float32)
    h = bn_dropout_relu(h, g3_ref[...], be3_ref[...], mask_ref[2])

    o_ref[...] = h.astype(o_ref.dtype)


def _pad_axis(a, axis, new_size):
    pad = new_size - a.shape[axis]
    if pad == 0:
        return a
    cfg = [(0, 0)] * a.ndim
    cfg[axis] = (0, pad)
    return jnp.pad(a, cfg)


def _round_up(n, m):
    return pl.cdiv(n, m) * m


def dqn_forward(x, params, dropout_key):
    """Fused DQN forward pass (training-mode BN + dropout + relu) in one
    Pallas call.

    x: (B, matrix_size + nb_cities) float32
    params: dict with w1/w2/w3 pre-transposed to (in, out), g*/be* of shape
            (1, dim).  Linear biases (b1/b2/b3), if present, are ignored —
            they are mathematically cancelled by the BN mean subtraction.
    dropout_key: jax PRNG key used to draw the dropout masks.
    """
    B, d_in = x.shape
    d_h = params["w1"].shape[1]
    d_out = params["w3"].shape[1]

    b_p = _round_up(B, SUBLANE)
    d_in_p = _round_up(d_in, LANE)
    d_h_p = _round_up(d_h, LANE)
    d_out_p = _round_up(d_out, LANE)

    inv_keep = 1.0 / (1.0 - P_DROP)

    # Zero-padded, bf16 weights (lane-dense 128-wide tiles for the MXU).
    def pad_w(w, rows, cols):
        return _pad_axis(_pad_axis(w, 0, rows), 1, cols).astype(jnp.bfloat16)

    w1 = pad_w(params["w1"], d_in_p, d_h_p)
    w2 = pad_w(params["w2"], d_h_p, d_h_p)
    w3 = pad_w(params["w3"], d_h_p, d_out_p)

    # Fold the dropout 1/(1-p) scale into gamma/beta; zero-pad to 128 lanes.
    def pad_affine(v, cols):
        v = jnp.asarray(v, jnp.float32).reshape(1, -1) * inv_keep
        return _pad_axis(v, 1, cols)

    g1, be1 = pad_affine(params["g1"], d_h_p), pad_affine(params["be1"], d_h_p)
    g2, be2 = pad_affine(params["g2"], d_h_p), pad_affine(params["be2"], d_h_p)
    g3, be3 = pad_affine(params["g3"], d_out_p), pad_affine(params["be3"], d_out_p)

    # One batched dropout-mask draw for all three layers (0/1 keep mask).
    # Rows beyond the real batch are zeroed so padded rows stay zero.
    d_mask = max(d_h_p, d_out_p)
    u = jax.random.uniform(dropout_key, (3, b_p, d_mask), jnp.float32)
    keep = (u >= jnp.float32(P_DROP)).astype(jnp.float32)
    row_valid = (jnp.arange(b_p) < B).astype(jnp.float32)[None, :, None]
    mask = keep * row_valid

    # Zero-pad x on both batch (sublanes) and features (lanes); bf16 for MXU.
    x_p = _pad_axis(_pad_axis(x, 0, b_p), 1, d_in_p).astype(jnp.bfloat16)

    vmem = pl.BlockSpec(memory_space=pltpu.MemorySpace.VMEM)

    kernel = functools.partial(_dqn_kernel, inv_b=float(1.0 / B))

    out = pl.pallas_call(
        kernel,
        out_shape=jax.ShapeDtypeStruct((b_p, d_out_p), jnp.float32),
        in_specs=[vmem] * 11,
        out_specs=vmem,
    )(x_p, mask, w1, g1, be1, w2, g2, be2, w3, g3, be3)

    return out[:B, :d_out]


def init_params(key, matrix_size, nb_cities):
    """Deterministic synthetic parameters matching the PyTorch module shapes."""
    d_in = matrix_size + nb_cities
    d_h = 2 * matrix_size
    d_out = nb_cities

    ks = jax.random.split(key, 6)

    def lin(kw, kb, fan_in, fan_out):
        bound = 1.0 / jnp.sqrt(fan_in)
        # stored as (in, out) == torch weight (out, in) transposed
        w = jax.random.uniform(kw, (fan_in, fan_out), jnp.float32, -bound, bound)
        b = jax.random.uniform(kb, (1, fan_out), jnp.float32, -bound, bound)
        return w, b

    w1, b1 = lin(ks[0], ks[1], d_in, d_h)
    w2, b2 = lin(ks[2], ks[3], d_h, d_h)
    w3, b3 = lin(ks[4], ks[5], d_h, d_out)

    # BatchNorm1d defaults: gamma = 1, beta = 0.
    # NOTE: b1/b2/b3 are kept for shape parity with the torch module but are
    # not used — training-mode BN cancels a preceding linear bias exactly.
    params = dict(
        w1=w1, b1=b1, g1=jnp.ones((1, d_h), jnp.float32), be1=jnp.zeros((1, d_h), jnp.float32),
        w2=w2, b2=b2, g2=jnp.ones((1, d_h), jnp.float32), be2=jnp.zeros((1, d_h), jnp.float32),
        w3=w3, b3=b3, g3=jnp.ones((1, d_out), jnp.float32), be3=jnp.zeros((1, d_out), jnp.float32),
    )
    return params


if __name__ == "__main__":
    matrix_size = 16   # len(distance_matrix)
    nb_cities = 16
    batch = 8          # BatchNorm1d training mode needs batch > 1

    key = jax.random.PRNGKey(0)
    kx, kp, kd = jax.random.split(key, 3)

    x = jax.random.normal(kx, (batch, matrix_size + nb_cities), jnp.float32)
    params = init_params(kp, matrix_size, nb_cities)

    out = dqn_forward(x, params, dropout_key=kd)
    out = jax.block_until_ready(out)

    assert out.shape == (batch, nb_cities)
    assert out.dtype == jnp.float32
    print("KERNEL_OK")
</pallas_src>

<mosaic_0001>
module attributes {stable_mosaic.version = 11 : i64} {
  func.func @_dqn_kernel(%arg0: memref<8x128xbf16, #tpu.memory_space<vmem>>, %arg1: memref<3x8x128xf32, #tpu.memory_space<vmem>>, %arg2: memref<128x128xbf16, #tpu.memory_space<vmem>>, %arg3: memref<1x128xf32, #tpu.memory_space<vmem>>, %arg4: memref<1x128xf32, #tpu.memory_space<vmem>>, %arg5: memref<128x128xbf16, #tpu.memory_space<vmem>>, %arg6: memref<1x128xf32, #tpu.memory_space<vmem>>, %arg7: memref<1x128xf32, #tpu.memory_space<vmem>>, %arg8: memref<128x128xbf16, #tpu.memory_space<vmem>>, %arg9: memref<1x128xf32, #tpu.memory_space<vmem>>, %arg10: memref<1x128xf32, #tpu.memory_space<vmem>>, %arg11: memref<8x128xf32, #tpu.memory_space<vmem>>) attributes {dimension_semantics = [], scalar_prefetch = 0 : i64, scratch_operands = 0 : i64, tpu.core_type = #tpu.core_type<tc>} {
    %c0 = arith.constant 0 : index
    %c0_0 = arith.constant 0 : index
    %0 = vector.load %arg0[%c0, %c0_0] : memref<8x128xbf16, #tpu.memory_space<vmem>>, vector<8x128xbf16>
    %c0_1 = arith.constant 0 : index
    %c0_2 = arith.constant 0 : index
    %1 = vector.load %arg2[%c0_1, %c0_2] : memref<128x128xbf16, #tpu.memory_space<vmem>>, vector<128x128xbf16>
    %cst = arith.constant dense<0.000000e+00> : vector<8x128xf32>
    %2 = tpu.matmul %0, %1, %cst {dimension_numbers = #tpu.dot_dimension_numbers<[1], [0], [0], [1], [0, 0, 1, 1], [], []>} : vector<8x128xbf16>, vector<128x128xbf16>, vector<8x128xf32> -> vector<8x128xf32>
    %c0_3 = arith.constant 0 : index
    %c0_4 = arith.constant 0 : index
    %3 = vector.load %arg3[%c0_3, %c0_4] : memref<1x128xf32, #tpu.memory_space<vmem>>, vector<1x128xf32>
    %c0_5 = arith.constant 0 : index
    %c0_6 = arith.constant 0 : index
    %4 = vector.load %arg4[%c0_5, %c0_6] : memref<1x128xf32, #tpu.memory_space<vmem>>, vector<1x128xf32>
    %c0_7 = arith.constant 0 : index
    %c0_8 = arith.constant 0 : index
    %c0_9 = arith.constant 0 : index
    %5 = vector.load %arg1[%c0_7, %c0_8, %c0_9] : memref<3x8x128xf32, #tpu.memory_space<vmem>>, vector<1x8x128xf32>
    %6 = vector.shape_cast %5 : vector<1x8x128xf32> to vector<8x128xf32>
    %cst_10 = arith.constant dense<0.000000e+00> : vector<128xf32>
    %7 = vector.multi_reduction <add>, %2, %cst_10 [0] : vector<8x128xf32> to vector<128xf32>
    %8 = vector.shape_cast %7 : vector<128xf32> to vector<1x128xf32>
    %9 = arith.mulf %2, %2 : vector<8x128xf32>
    %cst_11 = arith.constant dense<0.000000e+00> : vector<128xf32>
    %10 = vector.multi_reduction <add>, %9, %cst_11 [0] : vector<8x128xf32> to vector<128xf32>
    %11 = vector.shape_cast %10 : vector<128xf32> to vector<1x128xf32>
    %cst_12 = arith.constant 1.250000e-01 : f32
    %12 = vector.broadcast %cst_12 : f32 to vector<1x128xf32>
    %13 = arith.mulf %8, %12 : vector<1x128xf32>
    %cst_13 = arith.constant 1.250000e-01 : f32
    %14 = vector.broadcast %cst_13 : f32 to vector<1x128xf32>
    %15 = arith.mulf %11, %14 : vector<1x128xf32>
    %16 = arith.mulf %13, %13 : vector<1x128xf32>
    %17 = arith.subf %15, %16 : vector<1x128xf32>
    %cst_14 = arith.constant 9.99999974E-6 : f32
    %18 = vector.broadcast %cst_14 : f32 to vector<1x128xf32>
    %19 = arith.addf %17, %18 : vector<1x128xf32>
    %20 = math.rsqrt %19 : vector<1x128xf32>
    %21 = arith.mulf %3, %20 : vector<1x128xf32>
    %22 = arith.mulf %13, %21 : vector<1x128xf32>
    %23 = arith.subf %4, %22 : vector<1x128xf32>
    %24 = vector.broadcast %21 : vector<1x128xf32> to vector<8x128xf32>
    %25 = arith.mulf %2, %24 : vector<8x128xf32>
    %26 = vector.broadcast %23 : vector<1x128xf32> to vector<8x128xf32>
    %27 = arith.addf %25, %26 : vector<8x128xf32>
    %cst_15 = arith.constant 0.000000e+00 : f32
    %28 = vector.broadcast %cst_15 : f32 to vector<8x128xf32>
    %29 = arith.maximumf %27, %28 : vector<8x128xf32>
    %30 = arith.mulf %29, %6 : vector<8x128xf32>
    %31 = arith.truncf %30 : vector<8x128xf32> to vector<8x128xbf16>
    %c0_16 = arith.constant 0 : index
    %c0_17 = arith.constant 0 : index
    %32 = vector.load %arg5[%c0_16, %c0_17] : memref<128x128xbf16, #tpu.memory_space<vmem>>, vector<128x128xbf16>
    %cst_18 = arith.constant dense<0.000000e+00> : vector<8x128xf32>
    %33 = tpu.matmul %31, %32, %cst_18 {dimension_numbers = #tpu.dot_dimension_numbers<[1], [0], [0], [1], [0, 0, 1, 1], [], []>} : vector<8x128xbf16>, vector<128x128xbf16>, vector<8x128xf32> -> vector<8x128xf32>
    %c0_19 = arith.constant 0 : index
    %c0_20 = arith.constant 0 : index
    %34 = vector.load %arg6[%c0_19, %c0_20] : memref<1x128xf32, #tpu.memory_space<vmem>>, vector<1x128xf32>
    %c0_21 = arith.constant 0 : index
    %c0_22 = arith.constant 0 : index
    %35 = vector.load %arg7[%c0_21, %c0_22] : memref<1x128xf32, #tpu.memory_space<vmem>>, vector<1x128xf32>
    %c1 = arith.constant 1 : index
    %c0_23 = arith.constant 0 : index
    %c0_24 = arith.constant 0 : index
    %36 = vector.load %arg1[%c1, %c0_23, %c0_24] : memref<3x8x128xf32, #tpu.memory_space<vmem>>, vector<1x8x128xf32>
    %37 = vector.shape_cast %36 : vector<1x8x128xf32> to vector<8x128xf32>
    %cst_25 = arith.constant dense<0.000000e+00> : vector<128xf32>
    %38 = vector.multi_reduction <add>, %33, %cst_25 [0] : vector<8x128xf32> to vector<128xf32>
    %39 = vector.shape_cast %38 : vector<128xf32> to vector<1x128xf32>
    %40 = arith.mulf %33, %33 : vector<8x128xf32>
    %cst_26 = arith.constant dense<0.000000e+00> : vector<128xf32>
    %41 = vector.multi_reduction <add>, %40, %cst_26 [0] : vector<8x128xf32> to vector<128xf32>
    %42 = vector.shape_cast %41 : vector<128xf32> to vector<1x128xf32>
    %cst_27 = arith.constant 1.250000e-01 : f32
    %43 = vector.broadcast %cst_27 : f32 to vector<1x128xf32>
    %44 = arith.mulf %39, %43 : vector<1x128xf32>
    %cst_28 = arith.constant 1.250000e-01 : f32
    %45 = vector.broadcast %cst_28 : f32 to vector<1x128xf32>
    %46 = arith.mulf %42, %45 : vector<1x128xf32>
    %47 = arith.mulf %44, %44 : vector<1x128xf32>
    %48 = arith.subf %46, %47 : vector<1x128xf32>
    %cst_29 = arith.constant 9.99999974E-6 : f32
    %49 = vector.broadcast %cst_29 : f32 to vector<1x128xf32>
    %50 = arith.addf %48, %49 : vector<1x128xf32>
    %51 = math.rsqrt %50 : vector<1x128xf32>
    %52 = arith.mulf %34, %51 : vector<1x128xf32>
    %53 = arith.mulf %44, %52 : vector<1x128xf32>
    %54 = arith.subf %35, %53 : vector<1x128xf32>
    %55 = vector.broadcast %52 : vector<1x128xf32> to vector<8x128xf32>
    %56 = arith.mulf %33, %55 : vector<8x128xf32>
    %57 = vector.broadcast %54 : vector<1x128xf32> to vector<8x128xf32>
    %58 = arith.addf %56, %57 : vector<8x128xf32>
    %cst_30 = arith.constant 0.000000e+00 : f32
    %59 = vector.broadcast %cst_30 : f32 to vector<8x128xf32>
    %60 = arith.maximumf %58, %59 : vector<8x128xf32>
    %61 = arith.mulf %60, %37 : vector<8x128xf32>
    %62 = arith.truncf %61 : vector<8x128xf32> to vector<8x128xbf16>
    %c0_31 = arith.constant 0 : index
    %c0_32 = arith.constant 0 : index
    %63 = vector.load %arg8[%c0_31, %c0_32] : memref<128x128xbf16, #tpu.memory_space<vmem>>, vector<128x128xbf16>
    %cst_33 = arith.constant dense<0.000000e+00> : vector<8x128xf32>
    %64 = tpu.matmul %62, %63, %cst_33 {dimension_numbers = #tpu.dot_dimension_numbers<[1], [0], [0], [1], [0, 0, 1, 1], [], []>} : vector<8x128xbf16>, vector<128x128xbf16>, vector<8x128xf32> -> vector<8x128xf32>
    %c0_34 = arith.constant 0 : index
    %c0_35 = arith.constant 0 : index
    %65 = vector.load %arg9[%c0_34, %c0_35] : memref<1x128xf32, #tpu.memory_space<vmem>>, vector<1x128xf32>
    %c0_36 = arith.constant 0 : index
    %c0_37 = arith.constant 0 : index
    %66 = vector.load %arg10[%c0_36, %c0_37] : memref<1x128xf32, #tpu.memory_space<vmem>>, vector<1x128xf32>
    %c2 = arith.constant 2 : index
    %c0_38 = arith.constant 0 : index
    %c0_39 = arith.constant 0 : index
    %67 = vector.load %arg1[%c2, %c0_38, %c0_39] : memref<3x8x128xf32, #tpu.memory_space<vmem>>, vector<1x8x128xf32>
    %68 = vector.shape_cast %67 : vector<1x8x128xf32> to vector<8x128xf32>
    %cst_40 = arith.constant dense<0.000000e+00> : vector<128xf32>
    %69 = vector.multi_reduction <add>, %64, %cst_40 [0] : vector<8x128xf32> to vector<128xf32>
    %70 = vector.shape_cast %69 : vector<128xf32> to vector<1x128xf32>
    %71 = arith.mulf %64, %64 : vector<8x128xf32>
    %cst_41 = arith.constant dense<0.000000e+00> : vector<128xf32>
    %72 = vector.multi_reduction <add>, %71, %cst_41 [0] : vector<8x128xf32> to vector<128xf32>
    %73 = vector.shape_cast %72 : vector<128xf32> to vector<1x128xf32>
    %cst_42 = arith.constant 1.250000e-01 : f32
    %74 = vector.broadcast %cst_42 : f32 to vector<1x128xf32>
    %75 = arith.mulf %70, %74 : vector<1x128xf32>
    %cst_43 = arith.constant 1.250000e-01 : f32
    %76 = vector.broadcast %cst_43 : f32 to vector<1x128xf32>
    %77 = arith.mulf %73, %76 : vector<1x128xf32>
    %78 = arith.mulf %75, %75 : vector<1x128xf32>
    %79 = arith.subf %77, %78 : vector<1x128xf32>
    %cst_44 = arith.constant 9.99999974E-6 : f32
    %80 = vector.broadcast %cst_44 : f32 to vector<1x128xf32>
    %81 = arith.addf %79, %80 : vector<1x128xf32>
    %82 = math.rsqrt %81 : vector<1x128xf32>
    %83 = arith.mulf %65, %82 : vector<1x128xf32>
    %84 = arith.mulf %75, %83 : vector<1x128xf32>
    %85 = arith.subf %66, %84 : vector<1x128xf32>
    %86 = vector.broadcast %83 : vector<1x128xf32> to vector<8x128xf32>
    %87 = arith.mulf %64, %86 : vector<8x128xf32>
    %88 = vector.broadcast %85 : vector<1x128xf32> to vector<8x128xf32>
    %89 = arith.addf %87, %88 : vector<8x128xf32>
    %cst_45 = arith.constant 0.000000e+00 : f32
    %90 = vector.broadcast %cst_45 : f32 to vector<8x128xf32>
    %91 = arith.maximumf %89, %90 : vector<8x128xf32>
    %92 = arith.mulf %91, %68 : vector<8x128xf32>
    %c0_46 = arith.constant 0 : index
    %c0_47 = arith.constant 0 : index
    %93 = vector.load %arg11[%c0_46, %c0_47] : memref<8x128xf32, #tpu.memory_space<vmem>>, vector<8x128xf32>
    tpu.vector_store %arg11[%c0_46, %c0_47], %92 {strides = array<i32>} : memref<8x128xf32, #tpu.memory_space<vmem>>, vector<8x128xf32>,
    return
  }
}

</mosaic_0001>

<llo_original>
// kernel: tpu_custom_call.1
$region0: #{tpu_custom_call.1}
  #allocation0 [shape = 'u32[]', space=smem, size = 0x4, offset = 0x4, fixed_abs, tag = 'smem constant byte address 0x4 - core index']
  #allocation1 [shape = 'u32[72,128]{1,0:T(1,128)}', space=vmem, size = 0x9000, scoped, tag = 'internal scratch']
  %s0 = inlined_call_operand.hbm [shape: bf16[8,128], index: 0, kind: input, shape index: {}]
  %s1 = inlined_call_operand.hbm [shape: f32[3,8,128], index: 1, kind: input, shape index: {}]
  %s2 = inlined_call_operand.hbm [shape: bf16[128,128], index: 2, kind: input, shape index: {}]
  %s3 = inlined_call_operand.vmem [shape: f32[1,128], index: 3, kind: input, shape index: {}]
  %s4 = inlined_call_operand.vmem [shape: f32[1,128], index: 4, kind: input, shape index: {}]
  %s5 = inlined_call_operand.hbm [shape: bf16[128,128], index: 5, kind: input, shape index: {}]
  %s6 = inlined_call_operand.vmem [shape: f32[1,128], index: 6, kind: input, shape index: {}]
  %s7 = inlined_call_operand.vmem [shape: f32[1,128], index: 7, kind: input, shape index: {}]
  %s8 = inlined_call_operand.hbm [shape: bf16[128,128], index: 8, kind: input, shape index: {}]
  %s9 = inlined_call_operand.vmem [shape: f32[1,128], index: 9, kind: input, shape index: {}]
  %s10 = inlined_call_operand.vmem [shape: f32[1,128], index: 10, kind: input, shape index: {}]
  %s11 = inlined_call_operand.hbm [shape: f32[8,128], index: 11, kind: output, shape index: {}]
  %s12 = sld [smem:[#allocation0]]
  $region74: #{tpu_custom_call.1} parent=0
    _
  %s14 = ssub.s32 1, %s12
  %s15 = scalar_select 0, %s14, %s12
  $region1: #{tpu_custom_call.1} parent=0
    #allocation2 [shape = 'u8[2048]{0}', space=vmem, size = 0x800, scoped, tag = 'input window, operand 0, single buffered']
    #allocation3 [shape = 's32[1]{0}', space=sflag, size = 0x4, scoped, tag = 'scoped memory for tpu_custom_call.1']
    #allocation4 [shape = 's32[1]{0}', space=sflag, size = 0x4, scoped, tag = 'scoped memory for tpu_custom_call.1']
    #allocation5 [shape = 'u8[12288]{0}', space=vmem, size = 0x3000, scoped, tag = 'input window, operand 1, single buffered']
    #allocation6 [shape = 's32[1]{0}', space=sflag, size = 0x4, scoped, tag = 'scoped memory for tpu_custom_call.1']
    #allocation7 [shape = 'u8[32768]{0}', space=vmem, size = 0x8000, scoped, tag = 'input window, operand 2, single buffered']
    #allocation8 [shape = 'u8[32768]{0}', space=vmem, size = 0x8000, scoped, tag = 'input window, operand 5, single buffered']
    #allocation9 [shape = 's32[1]{0}', space=sflag, size = 0x4, scoped, tag = 'scoped memory for tpu_custom_call.1']
    #allocation10 [shape = 'u8[32768]{0}', space=vmem, size = 0x8000, scoped, tag = 'input window, operand 8, single buffered']
    #allocation11 [shape = 'u8[4096]{0}', space=vmem, size = 0x1000, scoped, tag = 'output window, operand 0, single buffered']
    %16 = vsyncpa [#allocation3], 0
    %17 = vsyncpa [#allocation6], 0
    %18 = vsyncpa [#allocation9], 0
    %19 = vsyncpa [#allocation4], 0
    // Predicated region
    $region2: #{tpu_custom_call.1} parent=1 // pred_check
      _
    $region3: #{tpu_custom_call.1} parent=1 // pred_check_branch
      %21 = sbr.rel (0) target = $region5
    $region4: #{tpu_custom_call.1} parent=1 // pred_region
      %23 = vsyncadd [#allocation3], 0
      %s25 = sshll.u32 %s0, 4
      %s26 = int_to_ptr.hbm [resolvable:$true] %s25
      %s27 = sshll.u32 [#allocation2], 4
      %s28 = int_to_ptr.vmem [resolvable:$true] %s27
      %30 = dma.hbm_to_vmem [thread:$0]  %s26, 64, %s28, [#allocation3]
    $region5: #{tpu_custom_call.1} parent=1 // pred_fallthru
      _
    // Predicated region
    $region6: #{tpu_custom_call.1} parent=1 // pred_check
      _
    $region7: #{tpu_custom_call.1} parent=1 // pred_check_branch
      %32 = sbr.rel (0) target = $region9
    $region8: #{tpu_custom_call.1} parent=1 // pred_region
      %34 = vsyncadd [#allocation6], 0
      %s35 = sshll.u32 %s1, 4
      %s36 = int_to_ptr.hbm [resolvable:$true] %s35
      %s37 = sshll.u32 [#allocation5], 4
      %s38 = int_to_ptr.vmem [resolvable:$true] %s37
      %43 = dma.hbm_to_vmem [thread:$0]  %s36, 384, %s38, [#allocation6], 128, 128, 8
    $region9: #{tpu_custom_call.1} parent=1 // pred_fallthru
      _
    // Predicated region
    $region10: #{tpu_custom_call.1} parent=1 // pred_check
      _
    $region11: #{tpu_custom_call.1} parent=1 // pred_check_branch
      %45 = sbr.rel (0) target = $region13
    $region12: #{tpu_custom_call.1} parent=1 // pred_region
      %47 = vsyncadd [#allocation6], 0
      %s48 = sshll.u32 %s2, 4
      %s49 = int_to_ptr.hbm [resolvable:$true] %s48
      %s50 = sshll.u32 [#allocation7], 4
      %s51 = int_to_ptr.vmem [resolvable:$true] %s50
      %56 = dma.hbm_to_vmem [thread:$0]  %s49, 1024, %s51, [#allocation6], 64, 64, 4
    $region13: #{tpu_custom_call.1} parent=1 // pred_fallthru
      _
    // Predicated region
    $region14: #{tpu_custom_call.1} parent=1 // pred_check
      _
    $region15: #{tpu_custom_call.1} parent=1 // pred_check_branch
      %58 = sbr.rel (0) target = $region17
    $region16: #{tpu_custom_call.1} parent=1 // pred_region
      _
    $region17: #{tpu_custom_call.1} parent=1 // pred_fallthru
      _
    // Predicated region
    $region18: #{tpu_custom_call.1} parent=1 // pred_check
      _
    $region19: #{tpu_custom_call.1} parent=1 // pred_check_branch
      %60 = sbr.rel (0) target = $region21
    $region20: #{tpu_custom_call.1} parent=1 // pred_region
      _
    $region21: #{tpu_custom_call.1} parent=1 // pred_fallthru
      _
    // Predicated region
    $region22: #{tpu_custom_call.1} parent=1 // pred_check
      _
    $region23: #{tpu_custom_call.1} parent=1 // pred_check_branch
      %62 = sbr.rel (0) target = $region25
    $region24: #{tpu_custom_call.1} parent=1 // pred_region
      %64 = vsyncadd [#allocation9], 0
      %s65 = sshll.u32 %s5, 4
      %s66 = int_to_ptr.hbm [resolvable:$true] %s65
      %s67 = sshll.u32 [#allocation8], 4
      %s68 = int_to_ptr.vmem [resolvable:$true] %s67
      %73 = dma.hbm_to_vmem [thread:$0]  %s66, 1024, %s68, [#allocation9], 64, 64, 4
    $region25: #{tpu_custom_call.1} parent=1 // pred_fallthru
      _
    // Predicated region
    $region26: #{tpu_custom_call.1} parent=1 // pred_check
      _
    $region27: #{tpu_custom_call.1} parent=1 // pred_check_branch
      %75 = sbr.rel (0) target = $region29
    $region28: #{tpu_custom_call.1} parent=1 // pred_region
      _
    $region29: #{tpu_custom_call.1} parent=1 // pred_fallthru
      _
    // Predicated region
    $region30: #{tpu_custom_call.1} parent=1 // pred_check
      _
    $region31: #{tpu_custom_call.1} parent=1 // pred_check_branch
      %77 = sbr.rel (0) target = $region33
    $region32: #{tpu_custom_call.1} parent=1 // pred_region
      _
    $region33: #{tpu_custom_call.1} parent=1 // pred_fallthru
      _
    // Predicated region
    $region34: #{tpu_custom_call.1} parent=1 // pred_check
      _
    $region35: #{tpu_custom_call.1} parent=1 // pred_check_branch
      %79 = sbr.rel (0) target = $region37
    $region36: #{tpu_custom_call.1} parent=1 // pred_region
      %81 = vsyncadd [#allocation9], 0
      %s82 = sshll.u32 %s8, 4
      %s83 = int_to_ptr.hbm [resolvable:$true] %s82
      %s84 = sshll.u32 [#allocation10], 4
      %s85 = int_to_ptr.vmem [resolvable:$true] %s84
      %90 = dma.hbm_to_vmem [thread:$0]  %s83, 1024, %s85, [#allocation9], 64, 64, 4
    $region37: #{tpu_custom_call.1} parent=1 // pred_fallthru
      _
    // Predicated region
    $region38: #{tpu_custom_call.1} parent=1 // pred_check
      _
    $region39: #{tpu_custom_call.1} parent=1 // pred_check_branch
      %92 = sbr.rel (0) target = $region41
    $region40: #{tpu_custom_call.1} parent=1 // pred_region
      _
    $region41: #{tpu_custom_call.1} parent=1 // pred_fallthru
      _
    // Predicated region
    $region42: #{tpu_custom_call.1} parent=1 // pred_check
      _
    $region43: #{tpu_custom_call.1} parent=1 // pred_check_branch
      %94 = sbr.rel (0) target = $region45
    $region44: #{tpu_custom_call.1} parent=1 // pred_region
      _
    $region45: #{tpu_custom_call.1} parent=1 // pred_fallthru
      _
    // Predicated region
    $region46: #{tpu_custom_call.1} parent=1 // pred_check
      _
    $region47: #{tpu_custom_call.1} parent=1 // pred_check_branch
      %96 = sbr.rel (0) target = $region49
    $region48: #{tpu_custom_call.1} parent=1 // pred_region
      %98 = dma.done [#allocation3], 64
    $region49: #{tpu_custom_call.1} parent=1 // pred_fallthru
      _
    // Predicated region
    $region50: #{tpu_custom_call.1} parent=1 // pred_check
      _
    $region51: #{tpu_custom_call.1} parent=1 // pred_check_branch
      %100 = sbr.rel (0) target = $region53
    $region52: #{tpu_custom_call.1} parent=1 // pred_region
      %102 = dma.done [#allocation6], 384
    $region53: #{tpu_custom_call.1} parent=1 // pred_fallthru
      _
    // Predicated region
    $region54: #{tpu_custom_call.1} parent=1 // pred_check
      _
    $region55: #{tpu_custom_call.1} parent=1 // pred_check_branch
      %104 = sbr.rel (0) target = $region57
    $region56: #{tpu_custom_call.1} parent=1 // pred_region
      %106 = dma.done [#allocation6], 1024
    $region57: #{tpu_custom_call.1} parent=1 // pred_fallthru
      _
    // Predicated region
    $region58: #{tpu_custom_call.1} parent=1 // pred_check
      _
    $region59: #{tpu_custom_call.1} parent=1 // pred_check_branch
      %108 = sbr.rel (0) target = $region61
    $region60: #{tpu_custom_call.1} parent=1 // pred_region
      %110 = dma.done [#allocation9], 1024
    $region61: #{tpu_custom_call.1} parent=1 // pred_fallthru
      _
    // Predicated region
    $region62: #{tpu_custom_call.1} parent=1 // pred_check
      _
    $region63: #{tpu_custom_call.1} parent=1 // pred_check_branch
      %112 = sbr.rel (0) target = $region65
    $region64: #{tpu_custom_call.1} parent=1 // pred_region
      %114 = dma.done [#allocation9], 1024
    $region65: #{tpu_custom_call.1} parent=1 // pred_fallthru
      _
    %v115 = vld [vmem:[#allocation2] sm:$0xf]
    %v116 = vld [vmem:[#allocation7] sm:$0xf]
    %v117 = vld [vmem:[#allocation7 + $0x4] sm:$0xf]
    %v118 = vld [vmem:[#allocation7 + $0x8] sm:$0xf]
    %v119 = vld [vmem:[#allocation7 + $0xc] sm:$0xf]
    %v120 = vld [vmem:[#allocation7 + $0x10] sm:$0xf]
    %v121 = vld [vmem:[#allocation7 + $0x14] sm:$0xf]
    %v122 = vld [vmem:[#allocation7 + $0x18] sm:$0xf]
    %v123 = vld [vmem:[#allocation7 + $0x1c] sm:$0xf]
    %v124 = vld [vmem:[#allocation7 + $0x20] sm:$0xf]
    %v125 = vld [vmem:[#allocation7 + $0x24] sm:$0xf]
    %v126 = vld [vmem:[#allocation7 + $0x28] sm:$0xf]
    %v127 = vld [vmem:[#allocation7 + $0x2c] sm:$0xf]
    %v128 = vld [vmem:[#allocation7 + $0x30] sm:$0xf]
    %v129 = vld [vmem:[#allocation7 + $0x34] sm:$0xf]
    %v130 = vld [vmem:[#allocation7 + $0x38] sm:$0xf]
    %v131 = vld [vmem:[#allocation7 + $0x3c] sm:$0xf]
    %v148 = vunpack.c.l.b16 %v116
    %v149 = vunpack.c.l.b16 %v117
    %v150 = vunpack.c.l.b16 %v118
    %v151 = vunpack.c.l.b16 %v119
    %v152 = vunpack.c.l.b16 %v120
    %v153 = vunpack.c.l.b16 %v121
    %v154 = vunpack.c.l.b16 %v122
    %v155 = vunpack.c.l.b16 %v123
    %v156 = vunpack.c.l.b16 %v124
    %v157 = vunpack.c.l.b16 %v125
    %v158 = vunpack.c.l.b16 %v126
    %v159 = vunpack.c.l.b16 %v127
    %v160 = vunpack.c.l.b16 %v128
    %v161 = vunpack.c.l.b16 %v129
    %v162 = vunpack.c.l.b16 %v130
    %v163 = vunpack.c.l.b16 %v131
    %v164 = vpack.c.b16 %v149, %v148
    %v165 = vpack.c.b16 %v151, %v150
    %v166 = vpack.c.b16 %v153, %v152
    %v167 = vpack.c.b16 %v155, %v154
    %v168 = vpack.c.b16 %v157, %v156
    %v169 = vpack.c.b16 %v159, %v158
    %v170 = vpack.c.b16 %v161, %v160
    %v171 = vpack.c.b16 %v163, %v162
    %180 = vmatpush.bf16.msra.mxu0 %v171
    %181 = vmatpush.bf16.msra.mxu0 %v170
    %182 = vmatpush.bf16.msra.mxu0 %v169
    %183 = vmatpush.bf16.msra.mxu0 %v168
    %184 = vmatpush.bf16.msra.mxu0 %v167
    %185 = vmatpush.bf16.msra.mxu0 %v166
    %186 = vmatpush.bf16.msra.mxu0 %v165
    %187 = vmatpush.bf16.msra.mxu0 %v164
    %188 = vmatmul.bf16.gmra.mxu0 %v115
    %v189 = vpop.f32.mrf.mxu0
    %v190 = vadd.f32 0.0, %v189
    %v191 = vpop.f32.mrf.mxu0
    %192 = vdwg.mxu0
    %v193 = vld [vmem:[%s3] sm:$0x1]
    %v194 = vld [vmem:[%s4] sm:$0x1]
    %v195 = vld [vmem:[#allocation5] sm:$0xff]
    %v196 = vrot.slane %v190, 4
    %v197 = vadd.f32 %v190, %v196
    %v198 = vrot.slane %v197, 2
    %v199 = vadd.f32 %v197, %v198
    %v200 = vrot.slane %v199, 1
    %v201 = vadd.f32 %v199, %v200
    %v202 = vmul.f32 %v190, %v190
    %v203 = vrot.slane %v202, 4
    %v204 = vadd.f32 %v202, %v203
    %v205 = vrot.slane %v204, 2
    %v206 = vadd.f32 %v204, %v205
    %v207 = vrot.slane %v206, 1
    %v208 = vadd.f32 %v206, %v207
    %v209 = vmul.f32 %v201, 0.125
    %v210 = vmul.f32 %v208, 0.125
    %v211 = vmul.f32 %v209, %v209
    %v212 = vsub.f32 %v210, %v211
    %v213 = vadd.f32 %v212, 1e-05
    %v214 = vrsqrt.pop %v213
    %v215 = vmul.f32 %v214, %v213
    %v216 = vmul.f32 %v215, %v214
    %v217 = vmul.f32 0.5, %v216
    %v218 = vsub.f32 1.5, %v217
    %v219 = vmul.f32 %v214, %v218
    %vm220 = vweird.f32 %v213
    %vm221 = vweird.f32 %v214
    %vm222 = vmor %vm220, %vm221
    %v223 = vsel %vm222, %v214, %v219
    %v224 = vmul.f32 %v193, %v223
    %v225 = vmul.f32 %v209, %v224
    %v226 = vsub.f32 %v194, %v225
    %v228 = vperm.slane %v224, 0
    %v230 = vmul.f32 %v190, %v228
    %v232 = vperm.slane %v226, 0
    %v234 = vadd.f32 %v230, %v232
    %v235 = vmax.f32 %v234, 0.0
    %v236 = vmul.f32 %v235, %v195
    %v237 = vpack.c.bf16 %v236, %v236
    %v238 = vld [vmem:[#allocation8] sm:$0xf]
    %v239 = vld [vmem:[#allocation8 + $0x4] sm:$0xf]
    %v240 = vld [vmem:[#allocation8 + $0x8] sm:$0xf]
    %v241 = vld [vmem:[#allocation8 + $0xc] sm:$0xf]
    %v242 = vld [vmem:[#allocation8 + $0x10] sm:$0xf]
    %v243 = vld [vmem:[#allocation8 + $0x14] sm:$0xf]
    %v244 = vld [vmem:[#allocation8 + $0x18] sm:$0xf]
    %v245 = vld [vmem:[#allocation8 + $0x1c] sm:$0xf]
    %v246 = vld [vmem:[#allocation8 + $0x20] sm:$0xf]
    %v247 = vld [vmem:[#allocation8 + $0x24] sm:$0xf]
    %v248 = vld [vmem:[#allocation8 + $0x28] sm:$0xf]
    %v249 = vld [vmem:[#allocation8 + $0x2c] sm:$0xf]
    %v250 = vld [vmem:[#allocation8 + $0x30] sm:$0xf]
    %v251 = vld [vmem:[#allocation8 + $0x34] sm:$0xf]
    %v252 = vld [vmem:[#allocation8 + $0x38] sm:$0xf]
    %v253 = vld [vmem:[#allocation8 + $0x3c] sm:$0xf]
    %v270 = vunpack.c.l.b16 %v238
    %v271 = vunpack.c.l.b16 %v239
    %v272 = vunpack.c.l.b16 %v240
    %v273 = vunpack.c.l.b16 %v241
    %v274 = vunpack.c.l.b16 %v242
    %v275 = vunpack.c.l.b16 %v243
    %v276 = vunpack.c.l.b16 %v244
    %v277 = vunpack.c.l.b16 %v245
    %v278 = vunpack.c.l.b16 %v246
    %v279 = vunpack.c.l.b16 %v247
    %v280 = vunpack.c.l.b16 %v248
    %v281 = vunpack.c.l.b16 %v249
    %v282 = vunpack.c.l.b16 %v250
    %v283 = vunpack.c.l.b16 %v251
    %v284 = vunpack.c.l.b16 %v252
    %v285 = vunpack.c.l.b16 %v253
    %v286 = vpack.c.b16 %v271, %v270
    %v287 = vpack.c.b16 %v273, %v272
    %v288 = vpack.c.b16 %v275, %v274
    %v289 = vpack.c.b16 %v277, %v276
    %v290 = vpack.c.b16 %v279, %v278
    %v291 = vpack.c.b16 %v281, %v280
    %v292 = vpack.c.b16 %v283, %v282
    %v293 = vpack.c.b16 %v285, %v284
    %302 = vmatpush.bf16.msra.mxu0 %v293
    %303 = vmatpush.bf16.msra.mxu0 %v292
    %304 = vmatpush.bf16.msra.mxu0 %v291
    %305 = vmatpush.bf16.msra.mxu0 %v290
    %306 = vmatpush.bf16.msra.mxu0 %v289
    %307 = vmatpush.bf16.msra.mxu0 %v288
    %308 = vmatpush.bf16.msra.mxu0 %v287
    %309 = vmatpush.bf16.msra.mxu0 %v286
    %310 = vmatmul.bf16.gmra.mxu0 %v237
    %v311 = vpop.f32.mrf.mxu0
    %v312 = vadd.f32 0.0, %v311
    %v313 = vpop.f32.mrf.mxu0
    %314 = vdwg.mxu0
    %v315 = vld [vmem:[%s6] sm:$0x1]
    %v316 = vld [vmem:[%s7] sm:$0x1]
    %s317 = scalar_lea.vmem [#allocation5], 8
    %v318 = vld [vmem:[%s317] sm:$0xff]
    %v319 = vrot.slane %v312, 4
    %v320 = vadd.f32 %v312, %v319
    %v321 = vrot.slane %v320, 2
    %v322 = vadd.f32 %v320, %v321
    %v323 = vrot.slane %v322, 1
    %v324 = vadd.f32 %v322, %v323
    %v325 = vmul.f32 %v312, %v312
    %v326 = vrot.slane %v325, 4
    %v327 = vadd.f32 %v325, %v326
    %v328 = vrot.slane %v327, 2
    %v329 = vadd.f32 %v327, %v328
    %v330 = vrot.slane %v329, 1
    %v331 = vadd.f32 %v329, %v330
    %v332 = vmul.f32 %v324, 0.125
    %v333 = vmul.f32 %v331, 0.125
    %v334 = vmul.f32 %v332, %v332
    %v335 = vsub.f32 %v333, %v334
    %v336 = vadd.f32 %v335, 1e-05
    %v337 = vrsqrt.pop %v336
    %v338 = vmul.f32 %v337, %v336
    %v339 = vmul.f32 %v338, %v337
    %v340 = vmul.f32 0.5, %v339
    %v341 = vsub.f32 1.5, %v340
    %v342 = vmul.f32 %v337, %v341
    %vm343 = vweird.f32 %v336
    %vm344 = vweird.f32 %v337
    %vm345 = vmor %vm343, %vm344
    %v346 = vsel %vm345, %v337, %v342
    %v347 = vmul.f32 %v315, %v346
    %v348 = vmul.f32 %v332, %v347
    %v349 = vsub.f32 %v316, %v348
    %v351 = vperm.slane %v347, 0
    %v353 = vmul.f32 %v312, %v351
    %v355 = vperm.slane %v349, 0
    %v357 = vadd.f32 %v353, %v355
    %v358 = vmax.f32 %v357, 0.0
    %v359 = vmul.f32 %v358, %v318
    %v360 = vpack.c.bf16 %v359, %v359
    %v361 = vld [vmem:[#allocation10] sm:$0xf]
    %v362 = vld [vmem:[#allocation10 + $0x4] sm:$0xf]
    %v363 = vld [vmem:[#allocation10 + $0x8] sm:$0xf]
    %v364 = vld [vmem:[#allocation10 + $0xc] sm:$0xf]
    %v365 = vld [vmem:[#allocation10 + $0x10] sm:$0xf]
    %v366 = vld [vmem:[#allocation10 + $0x14] sm:$0xf]
    %v367 = vld [vmem:[#allocation10 + $0x18] sm:$0xf]
    %v368 = vld [vmem:[#allocation10 + $0x1c] sm:$0xf]
    %v369 = vld [vmem:[#allocation10 + $0x20] sm:$0xf]
    %v370 = vld [vmem:[#allocation10 + $0x24] sm:$0xf]
    %v371 = vld [vmem:[#allocation10 + $0x28] sm:$0xf]
    %v372 = vld [vmem:[#allocation10 + $0x2c] sm:$0xf]
    %v373 = vld [vmem:[#allocation10 + $0x30] sm:$0xf]
    %v374 = vld [vmem:[#allocation10 + $0x34] sm:$0xf]
    %v375 = vld [vmem:[#allocation10 + $0x38] sm:$0xf]
    %v376 = vld [vmem:[#allocation10 + $0x3c] sm:$0xf]
    %v393 = vunpack.c.l.b16 %v361
    %v394 = vunpack.c.l.b16 %v362
    %v395 = vunpack.c.l.b16 %v363
    %v396 = vunpack.c.l.b16 %v364
    %v397 = vunpack.c.l.b16 %v365
    %v398 = vunpack.c.l.b16 %v366
    %v399 = vunpack.c.l.b16 %v367
    %v400 = vunpack.c.l.b16 %v368
    %v401 = vunpack.c.l.b16 %v369
    %v402 = vunpack.c.l.b16 %v370
    %v403 = vunpack.c.l.b16 %v371
    %v404 = vunpack.c.l.b16 %v372
    %v405 = vunpack.c.l.b16 %v373
    %v406 = vunpack.c.l.b16 %v374
    %v407 = vunpack.c.l.b16 %v375
    %v408 = vunpack.c.l.b16 %v376
    %v409 = vpack.c.b16 %v394, %v393
    %v410 = vpack.c.b16 %v396, %v395
    %v411 = vpack.c.b16 %v398, %v397
    %v412 = vpack.c.b16 %v400, %v399
    %v413 = vpack.c.b16 %v402, %v401
    %v414 = vpack.c.b16 %v404, %v403
    %v415 = vpack.c.b16 %v406, %v405
    %v416 = vpack.c.b16 %v408, %v407
    %425 = vmatpush.bf16.msra.mxu0 %v416
    %426 = vmatpush.bf16.msra.mxu0 %v415
    %427 = vmatpush.bf16.msra.mxu0 %v414
    %428 = vmatpush.bf16.msra.mxu0 %v413
    %429 = vmatpush.bf16.msra.mxu0 %v412
    %430 = vmatpush.bf16.msra.mxu0 %v411
    %431 = vmatpush.bf16.msra.mxu0 %v410
    %432 = vmatpush.bf16.msra.mxu0 %v409
    %433 = vmatmul.bf16.gmra.mxu0 %v360
    %v434 = vpop.f32.mrf.mxu0
    %v435 = vadd.f32 0.0, %v434
    %v436 = vpop.f32.mrf.mxu0
    %437 = vdwg.mxu0
    %v438 = vld [vmem:[%s9] sm:$0x1]
    %v439 = vld [vmem:[%s10] sm:$0x1]
    %s440 = scalar_lea.vmem [#allocation5], 16
    %v441 = vld [vmem:[%s440] sm:$0xff]
    %v442 = vrot.slane %v435, 4
    %v443 = vadd.f32 %v435, %v442
    %v444 = vrot.slane %v443, 2
    %v445 = vadd.f32 %v443, %v444
    %v446 = vrot.slane %v445, 1
    %v447 = vadd.f32 %v445, %v446
    %v448 = vmul.f32 %v435, %v435
    %v449 = vrot.slane %v448, 4
    %v450 = vadd.f32 %v448, %v449
    %v451 = vrot.slane %v450, 2
    %v452 = vadd.f32 %v450, %v451
    %v453 = vrot.slane %v452, 1
    %v454 = vadd.f32 %v452, %v453
    %v455 = vmul.f32 %v447, 0.125
    %v456 = vmul.f32 %v454, 0.125
    %v457 = vmul.f32 %v455, %v455
    %v458 = vsub.f32 %v456, %v457
    %v459 = vadd.f32 %v458, 1e-05
    %v460 = vrsqrt.pop %v459
    %v461 = vmul.f32 %v460, %v459
    %v462 = vmul.f32 %v461, %v460
    %v463 = vmul.f32 0.5, %v462
    %v464 = vsub.f32 1.5, %v463
    %v465 = vmul.f32 %v460, %v464
    %vm466 = vweird.f32 %v459
    %vm467 = vweird.f32 %v460
    %vm468 = vmor %vm466, %vm467
    %v469 = vsel %vm468, %v460, %v465
    %v470 = vmul.f32 %v438, %v469
    %v471 = vmul.f32 %v455, %v470
    %v472 = vsub.f32 %v439, %v471
    %v474 = vperm.slane %v470, 0
    %v476 = vmul.f32 %v435, %v474
    %v478 = vperm.slane %v472, 0
    %v480 = vadd.f32 %v476, %v478
    %v481 = vmax.f32 %v480, 0.0
    %v482 = vmul.f32 %v481, %v441
    %483 = vst [vmem:[#allocation11] sm:$0xff] %v482
    // Predicated region
    $region66: #{tpu_custom_call.1} parent=1 // pred_check
      _
    $region67: #{tpu_custom_call.1} parent=1 // pred_check_branch
      %485 = sbr.rel (0) target = $region69
    $region68: #{tpu_custom_call.1} parent=1 // pred_region
      %487 = vsyncadd [#allocation4], 0
      %s489 = sshll.u32 [#allocation11], 4
      %s490 = int_to_ptr.vmem [resolvable:$true] %s489
      %s491 = sshll.u32 %s11, 4
      %s492 = int_to_ptr.hbm [resolvable:$true] %s491
      %494 = dma.vmem_to_hbm [thread:$0]  %s490, 128, %s492, [#allocation4]
    $region69: #{tpu_custom_call.1} parent=1 // pred_fallthru
      _
    // Predicated region
    $region70: #{tpu_custom_call.1} parent=1 // pred_check
      _
    $region71: #{tpu_custom_call.1} parent=1 // pred_check_branch
      %496 = sbr.rel (0) target = $region73
    $region72: #{tpu_custom_call.1} parent=1 // pred_region
      %498 = dma.done [#allocation4], 128
    $region73: #{tpu_custom_call.1} parent=1 // pred_fallthru
      _
    %499 = vsyncpa [#allocation3], 1
    %500 = vsyncpa [#allocation6], 1
    %501 = vsyncpa [#allocation9], 1
    %502 = vsyncpa [#allocation4], 1

</llo_original>
